<compile_context>
chip_gen: v6e
topology: v6e:2x2x1
jax: 0.10.0
libtpu: 0.0.40
codegen_flags: <defaults>
</compile_context>

<pallas_src>
import jax
import jax.numpy as jnp
from jax.experimental import pallas as pl
from jax.experimental.pallas import tpu as pltpu


def _dma_split_cat_kernel(x_ref, cat_ref, s0_ref, s1_ref, s2_ref, sem):
    # x_ref   : (B, 3, H*W)  raw (un-tiled) input ref
    # cat_ref : (B, 3, H*W)  fresh copy of the input (the "concatenated" result)
    # sX_ref  : (B, 1, H*W)  per-channel split outputs
    # sem     : DMA semaphores, one per in-flight copy
    cp_cat = pltpu.make_async_copy(x_ref, cat_ref, sem.at[0])
    cp0 = pltpu.make_async_copy(x_ref.at[:, 0:1, :], s0_ref, sem.at[1])
    cp1 = pltpu.make_async_copy(x_ref.at[:, 1:2, :], s1_ref, sem.at[2])
    cp2 = pltpu.make_async_copy(x_ref.at[:, 2:3, :], s2_ref, sem.at[3])

    # Start everything first so the copies overlap, then wait.
    cp_cat.start()
    cp0.start()
    cp1.start()
    cp2.start()

    cp_cat.wait()
    cp0.wait()
    cp1.wait()
    cp2.wait()


def model_forward(v1):
    """v1: (B, 3, H, W).  Returns (concatenated, (split0, split1, split2))."""
    B, C, H, W = v1.shape
    assert C == 3, "torch.split(v1, (1, 1, 1), dim=1) requires 3 channels"
    HW = H * W
    dtype = v1.dtype

    # Free contiguous reshape: each (batch, channel) slab is a contiguous H*W
    # run, so the per-channel DMAs below are simple 2-D strided copies.
    x2 = v1.reshape(B, C, HW)

    any_spec = pl.BlockSpec(memory_space=pl.ANY)

    cat3, s0, s1, s2 = pl.pallas_call(
        _dma_split_cat_kernel,
        out_shape=(
            jax.ShapeDtypeStruct((B, C, HW), dtype),
            jax.ShapeDtypeStruct((B, 1, HW), dtype),
            jax.ShapeDtypeStruct((B, 1, HW), dtype),
            jax.ShapeDtypeStruct((B, 1, HW), dtype),
        ),
        in_specs=[any_spec],
        out_specs=(any_spec, any_spec, any_spec, any_spec),
        scratch_shapes=[pltpu.SemaphoreType.DMA((4,))],
    )(x2)

    concatenated = cat3.reshape(B, C, H, W)
    splits = tuple(s.reshape(B, 1, H, W) for s in (s0, s1, s2))
    return concatenated, splits


def init_unused_features_params(key):
    # Deterministic init of the (unused-in-forward) ConvTranspose2d(4, 8, 5, 5)
    # weight, shape (in_channels=4, out_channels=8, kH=5, kW=5).
    return jax.random.normal(key, (4, 8, 5, 5), dtype=jnp.float32) * 0.05


if __name__ == "__main__":
    key = jax.random.PRNGKey(0)
    k_x, k_w = jax.random.split(key)

    _unused_convT_weight = init_unused_features_params(k_w)  # not used in forward

    # Small deterministic input: batch=2, channels=3 (required by split (1,1,1)),
    # spatial 16x16.
    x = jax.random.normal(k_x, (2, 3, 16, 16), dtype=jnp.float32)

    concatenated, splits = model_forward(x)
    jax.block_until_ready(concatenated)
    for s in splits:
        jax.block_until_ready(s)

    # Correctness checks against the reference semantics.
    assert concatenated.shape == x.shape
    assert jnp.array_equal(concatenated, x)
    for i, s in enumerate(splits):
        assert s.shape == (2, 1, 16, 16)
        assert jnp.array_equal(s, x[:, i:i + 1, :, :])

    # Exercise a larger (non-trivial, still small) shape, incl. HW not a
    # multiple of 128 -- irrelevant to the DMA path but kept as a regression
    # check.
    x_big = jax.random.normal(key, (2, 3, 48, 80), dtype=jnp.float32)
    cat_b, splits_b = model_forward(x_big)
    jax.block_until_ready(cat_b)
    assert jnp.array_equal(cat_b, x_big)
    for i, s in enumerate(splits_b):
        assert jnp.array_equal(s, x_big[:, i:i + 1, :, :])

    print("KERNEL_OK")
</pallas_src>

<mosaic_0001>
module attributes {stable_mosaic.version = 11 : i64} {
  func.func @_dma_split_cat_kernel(%arg0: memref<2x3x256xf32, #tpu.memory_space<any>>, %arg1: memref<2x3x256xf32, #tpu.memory_space<any>>, %arg2: memref<2x1x256xf32, #tpu.memory_space<any>>, %arg3: memref<2x1x256xf32, #tpu.memory_space<any>>, %arg4: memref<2x1x256xf32, #tpu.memory_space<any>>, %arg5: memref<4x!tpu.dma_semaphore, #tpu.memory_space<semaphore_mem>>) attributes {dimension_semantics = [], scalar_prefetch = 0 : i64, scratch_operands = 1 : i64, tpu.core_type = #tpu.core_type<tc>} {
    %c0_i32 = arith.constant 0 : i32
    %0 = tpu.memref_slice %arg5[%c0_i32] : memref<4x!tpu.dma_semaphore, #tpu.memory_space<semaphore_mem>> -> memref<1x!tpu.dma_semaphore, #tpu.memory_space<semaphore_mem>>
    %1 = tpu.memref_squeeze %0 : memref<1x!tpu.dma_semaphore, #tpu.memory_space<semaphore_mem>> -> memref<!tpu.dma_semaphore, #tpu.memory_space<semaphore_mem>>
    tpu.enqueue_dma source(%arg0 : memref<2x3x256xf32, #tpu.memory_space<any>>) target(%arg1 : memref<2x3x256xf32, #tpu.memory_space<any>>) target_semaphore(%1 : memref<!tpu.dma_semaphore, #tpu.memory_space<semaphore_mem>>)
    %c1_i32 = arith.constant 1 : i32
    %c0_i32_0 = arith.constant 0 : i32
    %c0_i32_1 = arith.constant 0 : i32
    %c0_i32_2 = arith.constant 0 : i32
    %2 = tpu.memref_slice %arg0[%c0_i32_0, %c0_i32_1, %c0_i32_2] : memref<2x3x256xf32, #tpu.memory_space<any>> -> memref<2x1x256xf32, #tpu.memory_space<any>>
    %3 = tpu.memref_slice %arg5[%c1_i32] : memref<4x!tpu.dma_semaphore, #tpu.memory_space<semaphore_mem>> -> memref<1x!tpu.dma_semaphore, #tpu.memory_space<semaphore_mem>>
    %4 = tpu.memref_squeeze %3 : memref<1x!tpu.dma_semaphore, #tpu.memory_space<semaphore_mem>> -> memref<!tpu.dma_semaphore, #tpu.memory_space<semaphore_mem>>
    tpu.enqueue_dma source(%2 : memref<2x1x256xf32, #tpu.memory_space<any>>) target(%arg2 : memref<2x1x256xf32, #tpu.memory_space<any>>) target_semaphore(%4 : memref<!tpu.dma_semaphore, #tpu.memory_space<semaphore_mem>>)
    %c2_i32 = arith.constant 2 : i32
    %c0_i32_3 = arith.constant 0 : i32
    %c1_i32_4 = arith.constant 1 : i32
    %c0_i32_5 = arith.constant 0 : i32
    %5 = tpu.memref_slice %arg0[%c0_i32_3, %c1_i32_4, %c0_i32_5] : memref<2x3x256xf32, #tpu.memory_space<any>> -> memref<2x1x256xf32, #tpu.memory_space<any>>
    %6 = tpu.memref_slice %arg5[%c2_i32] : memref<4x!tpu.dma_semaphore, #tpu.memory_space<semaphore_mem>> -> memref<1x!tpu.dma_semaphore, #tpu.memory_space<semaphore_mem>>
    %7 = tpu.memref_squeeze %6 : memref<1x!tpu.dma_semaphore, #tpu.memory_space<semaphore_mem>> -> memref<!tpu.dma_semaphore, #tpu.memory_space<semaphore_mem>>
    tpu.enqueue_dma source(%5 : memref<2x1x256xf32, #tpu.memory_space<any>>) target(%arg3 : memref<2x1x256xf32, #tpu.memory_space<any>>) target_semaphore(%7 : memref<!tpu.dma_semaphore, #tpu.memory_space<semaphore_mem>>)
    %c3_i32 = arith.constant 3 : i32
    %c0_i32_6 = arith.constant 0 : i32
    %c2_i32_7 = arith.constant 2 : i32
    %c0_i32_8 = arith.constant 0 : i32
    %8 = tpu.memref_slice %arg0[%c0_i32_6, %c2_i32_7, %c0_i32_8] : memref<2x3x256xf32, #tpu.memory_space<any>> -> memref<2x1x256xf32, #tpu.memory_space<any>>
    %9 = tpu.memref_slice %arg5[%c3_i32] : memref<4x!tpu.dma_semaphore, #tpu.memory_space<semaphore_mem>> -> memref<1x!tpu.dma_semaphore, #tpu.memory_space<semaphore_mem>>
    %10 = tpu.memref_squeeze %9 : memref<1x!tpu.dma_semaphore, #tpu.memory_space<semaphore_mem>> -> memref<!tpu.dma_semaphore, #tpu.memory_space<semaphore_mem>>
    tpu.enqueue_dma source(%8 : memref<2x1x256xf32, #tpu.memory_space<any>>) target(%arg4 : memref<2x1x256xf32, #tpu.memory_space<any>>) target_semaphore(%10 : memref<!tpu.dma_semaphore, #tpu.memory_space<semaphore_mem>>)
    %c0_i32_9 = arith.constant 0 : i32
    %11 = tpu.memref_slice %arg5[%c0_i32_9] : memref<4x!tpu.dma_semaphore, #tpu.memory_space<semaphore_mem>> -> memref<1x!tpu.dma_semaphore, #tpu.memory_space<semaphore_mem>>
    %12 = tpu.memref_squeeze %11 : memref<1x!tpu.dma_semaphore, #tpu.memory_space<semaphore_mem>> -> memref<!tpu.dma_semaphore, #tpu.memory_space<semaphore_mem>>
    tpu.wait_dma2 semaphore(%12 : memref<!tpu.dma_semaphore, #tpu.memory_space<semaphore_mem>>) src(%arg0 : memref<2x3x256xf32, #tpu.memory_space<any>>) dst(%arg1 : memref<2x3x256xf32, #tpu.memory_space<any>>)
    %c1_i32_10 = arith.constant 1 : i32
    %c0_i32_11 = arith.constant 0 : i32
    %c0_i32_12 = arith.constant 0 : i32
    %c0_i32_13 = arith.constant 0 : i32
    %13 = tpu.memref_slice %arg0[%c0_i32_11, %c0_i32_12, %c0_i32_13] : memref<2x3x256xf32, #tpu.memory_space<any>> -> memref<2x1x256xf32, #tpu.memory_space<any>>
    %14 = tpu.memref_slice %arg5[%c1_i32_10] : memref<4x!tpu.dma_semaphore, #tpu.memory_space<semaphore_mem>> -> memref<1x!tpu.dma_semaphore, #tpu.memory_space<semaphore_mem>>
    %15 = tpu.memref_squeeze %14 : memref<1x!tpu.dma_semaphore, #tpu.memory_space<semaphore_mem>> -> memref<!tpu.dma_semaphore, #tpu.memory_space<semaphore_mem>>
    tpu.wait_dma2 semaphore(%15 : memref<!tpu.dma_semaphore, #tpu.memory_space<semaphore_mem>>) src(%13 : memref<2x1x256xf32, #tpu.memory_space<any>>) dst(%arg2 : memref<2x1x256xf32, #tpu.memory_space<any>>)
    %c2_i32_14 = arith.constant 2 : i32
    %c0_i32_15 = arith.constant 0 : i32
    %c1_i32_16 = arith.constant 1 : i32
    %c0_i32_17 = arith.constant 0 : i32
    %16 = tpu.memref_slice %arg0[%c0_i32_15, %c1_i32_16, %c0_i32_17] : memref<2x3x256xf32, #tpu.memory_space<any>> -> memref<2x1x256xf32, #tpu.memory_space<any>>
    %17 = tpu.memref_slice %arg5[%c2_i32_14] : memref<4x!tpu.dma_semaphore, #tpu.memory_space<semaphore_mem>> -> memref<1x!tpu.dma_semaphore, #tpu.memory_space<semaphore_mem>>
    %18 = tpu.memref_squeeze %17 : memref<1x!tpu.dma_semaphore, #tpu.memory_space<semaphore_mem>> -> memref<!tpu.dma_semaphore, #tpu.memory_space<semaphore_mem>>
    tpu.wait_dma2 semaphore(%18 : memref<!tpu.dma_semaphore, #tpu.memory_space<semaphore_mem>>) src(%16 : memref<2x1x256xf32, #tpu.memory_space<any>>) dst(%arg3 : memref<2x1x256xf32, #tpu.memory_space<any>>)
    %c3_i32_18 = arith.constant 3 : i32
    %c0_i32_19 = arith.constant 0 : i32
    %c2_i32_20 = arith.constant 2 : i32
    %c0_i32_21 = arith.constant 0 : i32
    %19 = tpu.memref_slice %arg0[%c0_i32_19, %c2_i32_20, %c0_i32_21] : memref<2x3x256xf32, #tpu.memory_space<any>> -> memref<2x1x256xf32, #tpu.memory_space<any>>
    %20 = tpu.memref_slice %arg5[%c3_i32_18] : memref<4x!tpu.dma_semaphore, #tpu.memory_space<semaphore_mem>> -> memref<1x!tpu.dma_semaphore, #tpu.memory_space<semaphore_mem>>
    %21 = tpu.memref_squeeze %20 : memref<1x!tpu.dma_semaphore, #tpu.memory_space<semaphore_mem>> -> memref<!tpu.dma_semaphore, #tpu.memory_space<semaphore_mem>>
    tpu.wait_dma2 semaphore(%21 : memref<!tpu.dma_semaphore, #tpu.memory_space<semaphore_mem>>) src(%19 : memref<2x1x256xf32, #tpu.memory_space<any>>) dst(%arg4 : memref<2x1x256xf32, #tpu.memory_space<any>>)
    return
  }
}

</mosaic_0001>

<llo_original>
// kernel: tpu_custom_call.1
$region0: #{tpu_custom_call.1}
  #allocation0 [shape = 'u32[]', space=smem, size = 0x4, offset = 0x4, fixed_abs, tag = 'smem constant byte address 0x4 - core index']
  #allocation1 [shape = 'u32[144,128]{1,0:T(1,128)}', space=vmem, size = 0x12000, scoped, tag = 'internal scratch']
  #allocation2 [shape = 's32[4]{0}', space=sflag, size = 0x10, scoped, tag = 'scratch operand']
  #allocation3 [shape = 's32[]', space=sflag, size = 0x4, offset = 0, fixed_abs, tag = 'sflag constant byte address 0x0 - dummy sync flag']
  #allocation4 [shape = 's32[]', space=sflag, size = 0x4, offset = 0, fixed_abs, tag = 'sflag constant byte address 0x0 - dummy sync flag']
  #allocation5 [shape = 's32[]', space=sflag, size = 0x4, offset = 0, fixed_abs, tag = 'sflag constant byte address 0x0 - dummy sync flag']
  #allocation6 [shape = 's32[]', space=sflag, size = 0x4, offset = 0, fixed_abs, tag = 'sflag constant byte address 0x0 - dummy sync flag']
  %s0 = inlined_call_operand.vmem [shape: f32[2,3,256], index: 0, kind: input, shape index: {}]
  %s1 = inlined_call_operand.vmem [shape: f32[2,3,256], index: 1, kind: output, shape index: {0}]
  %s2 = inlined_call_operand.hbm [shape: f32[2,1,256], index: 2, kind: output, shape index: {1}]
  %s3 = inlined_call_operand.hbm [shape: f32[2,1,256], index: 3, kind: output, shape index: {2}]
  %s4 = inlined_call_operand.hbm [shape: f32[2,1,256], index: 4, kind: output, shape index: {3}]
  %5 = xla_tuple %s1, %s2, %s3, %s4
  %s6 = sld [smem:[#allocation0]]
  $region36: #{tpu_custom_call.1} parent=0
    _
  %s8 = ssub.s32 1, %s6
  %s9 = scalar_select 0, %s8, %s6
  %p11 = scmp.lt.u32.totalorder 16, 8
  %p12 = pneg %p11
  // Predicated region
  $region2: #{tpu_custom_call.1} parent=0 // pred_check
    _
  $region3: #{tpu_custom_call.1} parent=0 // pred_check_branch
    %14 = sbr.rel (%p11) target = $region5
  $region4: #{tpu_custom_call.1} parent=0 // pred_region
    %s30 = sand.u32 16, 7
    %p31 = scmp.eq.s32.totalorder %s30, 0
    // Predicated region
    $region17: #{tpu_custom_call.1} parent=4 // pred_check
      %p32 = pneg %p31
    $region18: #{tpu_custom_call.1} parent=4 // pred_check_branch
      %34 = sbr.rel (%p32) target = $region20
    $region19: #{tpu_custom_call.1} parent=4 // pred_region
      loop: start=0, step=1, limit=1
      $region21: #{tpu_custom_call.1} parent=19 // loop_pre_header
        _
      $region22: #{tpu_custom_call.1} parent=19 // loop_header
        %s36 = sphi 0, %s40
        %p37 = scmp.ge.s32.totalorder %s36, 1
        %s41 = sphi %s0, %s0
        %s42 = sphi %s1, %s1
      $region23: #{tpu_custom_call.1} parent=19 // loop_header_branch
        %39 = sbr.rel (%p37) target = $region27
      $region24: #{tpu_custom_call.1} parent=19 // loop_body
        %v43 = vld [vmem:[%s41] sm:$0xff]
        %44 = vst [vmem:[%s42] sm:$0xff] %v43
        %v45 = vld [vmem:[%s41 + $0x8] sm:$0xff]
        %46 = vst [vmem:[%s42 + $0x8] sm:$0xff] %v45
      $region25: #{tpu_custom_call.1} parent=19 // loop_footer
        %s40 = sadd.s32 1, %s36
      $region26: #{tpu_custom_call.1} parent=19 // loop_footer_branch
        %35 = sbr.rel target = $region22
      $region27: #{tpu_custom_call.1} parent=19 // loop_exit
        _
    $region20: #{tpu_custom_call.1} parent=4 // pred_fallthru
      _
    %p47 = pneg %p31
    // Predicated region
    $region28: #{tpu_custom_call.1} parent=4 // pred_check
      _
    $region29: #{tpu_custom_call.1} parent=4 // pred_check_branch
      %49 = sbr.rel (%p31) target = $region31
    $region30: #{tpu_custom_call.1} parent=4 // pred_region
      %s50 = sand.u32 16, 7
    $region31: #{tpu_custom_call.1} parent=4 // pred_fallthru
      _
  $region5: #{tpu_custom_call.1} parent=0 // pred_fallthru
    _
  // Predicated region
  $region6: #{tpu_custom_call.1} parent=0 // pred_check
    %p15 = pneg %p11
  $region7: #{tpu_custom_call.1} parent=0 // pred_check_branch
    %17 = sbr.rel (%p15) target = $region9
  $region8: #{tpu_custom_call.1} parent=0 // pred_region
    %s18 = sshll.u32 1, 16
    %s19 = ssub.s32 %s18, 1
    loop: start=0, step=1, limit=1
    $region10: #{tpu_custom_call.1} parent=8 // loop_pre_header
      _
    $region11: #{tpu_custom_call.1} parent=8 // loop_header
      %s21 = sphi 0, %s25
      %p22 = scmp.ge.s32.totalorder %s21, 1
      %s26 = sphi %s0, %s0
      %s27 = sphi %s1, %s1
    $region12: #{tpu_custom_call.1} parent=8 // loop_header_branch
      %24 = sbr.rel (%p22) target = $region16
    $region13: #{tpu_custom_call.1} parent=8 // loop_body
      %v28 = vld [vmem:[%s26] sm:%s19]
      %29 = vst [vmem:[%s27] sm:%s19] %v28
    $region14: #{tpu_custom_call.1} parent=8 // loop_footer
      %s25 = sadd.s32 1, %s21
    $region15: #{tpu_custom_call.1} parent=8 // loop_footer_branch
      %20 = sbr.rel target = $region11
    $region16: #{tpu_custom_call.1} parent=8 // loop_exit
      _
  $region9: #{tpu_custom_call.1} parent=0 // pred_fallthru
    _
  // Predicated region
  $region32: #{tpu_custom_call.1} parent=0 // pred_check
    _
  $region33: #{tpu_custom_call.1} parent=0 // pred_check_branch
    %53 = sbr.rel (0) target = $region35
  $region34: #{tpu_custom_call.1} parent=0 // pred_region
    %54 = vsyncadd [#allocation2], 256
  $region35: #{tpu_custom_call.1} parent=0 // pred_fallthru
    _
  %s55 = scalar_lea.sflag [#allocation2], 1
  %s57 = sshll.u32 %s0, 4
  %s58 = int_to_ptr.vmem [resolvable:$true] %s57
  %60 = dma.vmem_to_hbm [thread:$0]  %s58, 64, %s2, %s55, 64, 16, 1
  %s61 = scalar_lea.vmem %s0, 1
  %s62 = scalar_lea.sflag [#allocation2], 2
  %s64 = sshll.u32 %s61, 4
  %s65 = int_to_ptr.vmem [resolvable:$true] %s64
  %67 = dma.vmem_to_hbm [thread:$0]  %s65, 64, %s3, %s62, 64, 16, 1
  %s68 = scalar_lea.vmem %s0, 2
  %s69 = scalar_lea.sflag [#allocation2], 3
  %s71 = sshll.u32 %s68, 4
  %s72 = int_to_ptr.vmem [resolvable:$true] %s71
  %74 = dma.vmem_to_hbm [thread:$0]  %s72, 64, %s4, %s69, 64, 16, 1
  %s75 = smul.u32 4, 2
  %s76 = smul.u32 %s75, 1
  %s77 = smul.u32 %s76, 2
  %s78 = sshll.u32 %s77, 4
  %79 = dma.done [#allocation2], %s78
  %s80 = smul.u32 2, 1
  %s81 = smul.u32 %s80, 2
  %s82 = sshll.u32 %s81, 4
  %83 = dma.done %s55, %s82
  %s84 = sshll.u32 %s81, 4
  %85 = dma.done %s62, %s84
  %s86 = sshll.u32 %s81, 4
  %87 = dma.done %s69, %s86
  %88 = vsyncmov [#allocation2]
  %s89 = vpop.sfrf %88
  %p90 = scmp.eq.s32.totalorder %s89, 0
  %p91 = pneg %p90
  %93 = shalt.err (%p91)
  %s94 = scalar_lea.sflag [#allocation2], 1
  %95 = vsyncmov %s94
  %s96 = vpop.sfrf %95
  %p97 = scmp.eq.s32.totalorder %s96, 0
  %p98 = pneg %p97
  %100 = shalt.err (%p98)
  %s101 = scalar_lea.sflag [#allocation2], 2
  %102 = vsyncmov %s101
  %s103 = vpop.sfrf %102
  %p104 = scmp.eq.s32.totalorder %s103, 0
  %p105 = pneg %p104
  %107 = shalt.err (%p105)
  %s108 = scalar_lea.sflag [#allocation2], 3
  %109 = vsyncmov %s108
  %s110 = vpop.sfrf %109
  %p111 = scmp.eq.s32.totalorder %s110, 0
  %p112 = pneg %p111
  %114 = shalt.err (%p112)

</llo_original>
